<compile_context>
chip_gen: v6e
topology: v6e:2x2x1
jax: 0.10.0
libtpu: 0.0.40
codegen_flags: <defaults>
</compile_context>

<pallas_src>
import math

import jax
import jax.numpy as jnp
from jax.experimental import pallas as pl
from jax.experimental.pallas import tpu as pltpu


def _hbm_copy_kernel(x_hbm_ref, o_hbm_ref):
    # Single HBM->HBM DMA of the whole (already reshaped, metadata-only)
    # array.  No VMEM staging, no vld/vst work, no pipeline steps.
    def body(sem):
        cp = pltpu.make_async_copy(x_hbm_ref, o_hbm_ref, sem)
        cp.start()
        cp.wait()

    pl.run_scoped(body, pltpu.SemaphoreType.DMA(()))


def reshape_forward(x: jax.Array, shape, *, materialize: bool = False) -> jax.Array:
    """Equivalent of Reshape(shape)(x): x.view(x.shape[0], *shape).

    materialize=False (default): metadata-only reshape — free, the fastest
    option on every TPU generation.
    materialize=True: force a fresh HBM buffer via a single HBM->HBM DMA
    Pallas kernel (useful only if a real copy is required by the caller).
    """
    b = x.shape[0]
    n_in = math.prod(x.shape[1:])
    n_out = math.prod(shape)
    assert n_in == n_out, f"cannot view {x.shape} as ({b}, *{shape})"
    out_shape = (b, *shape)

    # Metadata-only flatten/reshape (row-major == torch contiguous .view()).
    x_view = x.reshape(out_shape)

    total = b * n_in
    if not materialize or total == 0:
        return x_view

    itemsize = jnp.dtype(x.dtype).itemsize
    nbytes = total * itemsize

    return pl.pallas_call(
        _hbm_copy_kernel,
        out_shape=jax.ShapeDtypeStruct(out_shape, x.dtype),
        in_specs=[pl.BlockSpec(memory_space=pl.ANY)],
        out_specs=pl.BlockSpec(memory_space=pl.ANY),
        compiler_params=pltpu.CompilerParams(has_side_effects=True),
        cost_estimate=pl.CostEstimate(
            flops=0, transcendentals=0, bytes_accessed=2 * nbytes
        ),
    )(x_view)


if __name__ == "__main__":
    key = jax.random.PRNGKey(0)

    # Case 1: batch=2, channels=4, spatial=16x16 -> (4, 256), f32.
    x = jax.random.normal(key, (2, 4, 16, 16), dtype=jnp.float32)
    target_shape = (4, 256)  # 4*16*16 == 4*256
    ref = x.reshape(x.shape[0], *target_shape)

    # Default (free) metadata-only path.
    y_fast = jax.block_until_ready(reshape_forward(x, target_shape))
    assert y_fast.shape == (2, 4, 256) and y_fast.dtype == x.dtype
    assert bool(jnp.array_equal(y_fast, ref))

    # Materializing path: exercises the Pallas HBM->HBM DMA kernel.
    y_copy = jax.block_until_ready(reshape_forward(x, target_shape, materialize=True))
    assert y_copy.shape == (2, 4, 256) and y_copy.dtype == x.dtype
    assert bool(jnp.array_equal(y_copy, ref))

    # Case 2: bf16, batch=2, channels=8, spatial=8x8 -> (8, 64).
    x2 = jax.random.normal(jax.random.PRNGKey(1), (2, 8, 8, 8), dtype=jnp.bfloat16)
    ref2 = x2.reshape(2, 8, 64)
    y2_fast = jax.block_until_ready(reshape_forward(x2, (8, 64)))
    assert y2_fast.shape == (2, 8, 64) and y2_fast.dtype == x2.dtype
    assert bool(jnp.array_equal(y2_fast, ref2))
    y2_copy = jax.block_until_ready(reshape_forward(x2, (8, 64), materialize=True))
    assert y2_copy.shape == (2, 8, 64) and y2_copy.dtype == x2.dtype
    assert bool(jnp.array_equal(y2_copy, ref2))

    print("KERNEL_OK")
</pallas_src>

<mosaic_0001>
module attributes {stable_mosaic.version = 11 : i64} {
  func.func @_hbm_copy_kernel(%arg0: memref<2x4x256xf32, #tpu.memory_space<any>>, %arg1: memref<2x4x256xf32, #tpu.memory_space<any>>) attributes {dimension_semantics = [], scalar_prefetch = 0 : i64, scratch_operands = 0 : i64, tpu.core_type = #tpu.core_type<tc>} {
    "tpu.region"() ({
      %0 = tpu.sem_alloc : memref<!tpu.dma_semaphore, #tpu.memory_space<semaphore_mem>>
      tpu.enqueue_dma source(%arg0 : memref<2x4x256xf32, #tpu.memory_space<any>>) target(%arg1 : memref<2x4x256xf32, #tpu.memory_space<any>>) target_semaphore(%0 : memref<!tpu.dma_semaphore, #tpu.memory_space<semaphore_mem>>)
      tpu.wait_dma2 semaphore(%0 : memref<!tpu.dma_semaphore, #tpu.memory_space<semaphore_mem>>) src(%arg0 : memref<2x4x256xf32, #tpu.memory_space<any>>) dst(%arg1 : memref<2x4x256xf32, #tpu.memory_space<any>>)
      tpu.yield
    }) : () -> ()
    return
  }
}

</mosaic_0001>

<llo_original>
// kernel: tpu_custom_call.1
$region0: #{tpu_custom_call.1}
  #allocation0 [shape = 'u32[]', space=smem, size = 0x4, offset = 0x4, fixed_abs, tag = 'smem constant byte address 0x4 - core index']
  #allocation1 [shape = 'u32[144,128]{1,0:T(1,128)}', space=vmem, size = 0x12000, scoped, tag = 'internal scratch']
  #allocation3 [shape = 's32[]', space=sflag, size = 0x4, offset = 0, fixed_abs, tag = 'sflag constant byte address 0x0 - dummy sync flag']
  #allocation4 [shape = 'u32[0]{0}', space=smem, size = 0, offset = 0, fixed_abs, tag = 'smem constant byte address 0x0 - null']
  %s0 = inlined_call_operand.hbm [shape: f32[2,4,256], index: 0, kind: input, shape index: {}]
  %s1 = inlined_call_operand.hbm [shape: f32[2,4,256], index: 1, kind: output, shape index: {}]
  %s2 = sld [smem:[#allocation0]]
  $region3: #{tpu_custom_call.1} parent=0
    _
  %s4 = ssub.s32 1, %s2
  %s5 = scalar_select 0, %s4, %s2
  $region2: #{tpu_custom_call.1} parent=0
    #allocation2 [shape = 's32[1]{0}', space=sflag, size = 0x4, scoped, tag = 'scoped memory for tpu_custom_call.1']
    %s7 = sshll.u32 1, 14
    %s8 = sxor.u32 4294967295, %s7
    %12 = dma.general %s0, 256, %s1, [#allocation2], 131072, [#allocation4], 0, 0
    %s13 = smul.u32 4, 2
    %s14 = smul.u32 %s13, 1
    %s15 = smul.u32 %s14, 2
    %s16 = sshll.u32 %s15, 4
    %17 = dma.done [#allocation2], %s16

</llo_original>
